<compile_context>
chip_gen: v7x
topology: tpu7x:2x2x1
jax: 0.10.0
libtpu: 0.0.40
codegen_flags: <defaults>
</compile_context>

<pallas_src>
import jax
import jax.numpy as jnp
from jax.experimental import pallas as pl
from jax.experimental.pallas import tpu as pltpu


def _round_up(x, m):
    return (x + m - 1) // m * m


def _sublane_pack(dtype):
    # rows per packed vreg sublane group: f32 -> 8, bf16 -> 16, int8/fp8 -> 32
    return {4: 8, 2: 16, 1: 32}.get(jnp.dtype(dtype).itemsize, 8)


def _pick_ti(I, ti_req):
    """Largest multiple-of-128 divisor of I that is <= ti_req; else the whole I."""
    ti_req = max(128, min(ti_req, I))
    best = None
    if I % 128 == 0:
        d = 128
        while d <= ti_req:
            if I % d == 0:
                best = d
            d += 128
    # TODO(synk): for I not a multiple of 128 (rare) pad I + mask instead of ti=I.
    return best if best is not None else I


def _chip_config():
    """Generation-aware defaults: (VMEM capacity, token tile, intermediate tile, TCs/chip)."""
    kind = ""
    try:
        kind = jax.devices()[0].device_kind.lower()
    except Exception:
        pass
    cfg = dict(vmem_bytes=128 << 20, tm=256, ti=512, tcs=1)          # conservative default
    if "v7" in kind:
        cfg = dict(vmem_bytes=64 << 20, tm=512, ti=256, tcs=2)       # 64 MiB VMEM, 2 TCs
    elif "v6" in kind:
        cfg = dict(vmem_bytes=128 << 20, tm=512, ti=512, tcs=1)      # crossover ~650 F/B
    elif "v5e" in kind or "v5 lite" in kind or "v5litepod" in kind:
        cfg = dict(vmem_bytes=128 << 20, tm=256, ti=512, tcs=1)      # already compute-bound
    elif "v4" in kind:
        cfg = dict(vmem_bytes=128 << 20, tm=256, ti=512, tcs=2)
    try:
        cfg["vmem_bytes"] = int(pltpu.get_tpu_info().vmem_capacity_bytes)
    except Exception:
        pass
    return cfg


def _mlp_kernel_single(x_ref, w1_ref, w3_ref, w2_ref, o_ref):
    # Whole I fits in one block: no accumulator scratch, single pass.
    h1 = jnp.dot(x_ref[...], w1_ref[...], preferred_element_type=jnp.float32)
    h3 = jnp.dot(x_ref[...], w3_ref[...], preferred_element_type=jnp.float32)
    gated = (h1 * jax.nn.sigmoid(h1)) * h3
    o_ref[...] = jnp.dot(gated.astype(w2_ref.dtype), w2_ref[...],
                         preferred_element_type=jnp.float32).astype(o_ref.dtype)


def _mlp_kernel_multi(x_ref, w1_ref, w3_ref, w2_ref, o_ref, acc_ref):
    # x_ref : (tm, H)   token tile, resident across the I axis
    # w1/w3 : (H, ti)   up-proj column blocks for this I step
    # w2    : (ti, H)   down-proj row block for this I step
    # o_ref : (tm, H)   written only on the last I step
    # acc   : (tm, H)   f32 VMEM accumulator
    j = pl.program_id(1)
    last = pl.num_programs(1) - 1

    h1 = jnp.dot(x_ref[...], w1_ref[...], preferred_element_type=jnp.float32)
    h3 = jnp.dot(x_ref[...], w3_ref[...], preferred_element_type=jnp.float32)
    gated = (h1 * jax.nn.sigmoid(h1)) * h3            # SwiGLU gate in f32 (EUP sigmoid)
    part = jnp.dot(gated.astype(w2_ref.dtype), w2_ref[...],
                   preferred_element_type=jnp.float32)

    @pl.when(j == 0)
    def _():                                          # first step: overwrite (no zero-init pass)
        acc_ref[...] = part

    @pl.when(jnp.logical_and(j > 0, j < last))
    def _():
        acc_ref[...] += part

    @pl.when(j == last)
    def _():                                          # fold final partial straight into the output
        o_ref[...] = (acc_ref[...] + part).astype(o_ref.dtype)


def mlp_forward(x, w1, w3, w2, *, tm=None, ti=None):
    """x: (B, S, H); w1, w3: (H, I); w2: (I, H) -> (B, S, H).
    Weights are (in_dim, out_dim), i.e. transposed vs torch nn.Linear.weight."""
    B, S, H = x.shape
    I = w1.shape[1]
    M = B * S

    cfg = _chip_config()
    tm_req = tm if tm is not None else cfg["tm"]
    ti_req = ti if ti is not None else cfg["ti"]

    in_b = jnp.dtype(x.dtype).itemsize
    out_b = in_b
    pack = _sublane_pack(x.dtype)

    # ---- token tile (M axis, "parallel") ----
    M_aligned = _round_up(M, pack)
    tm = min(_round_up(tm_req, pack), M_aligned)
    # 2-TC chips (v7x/v4): guarantee >= 2 M steps so the second TensorCore has work.
    if cfg["tcs"] >= 2 and M_aligned <= tm and M_aligned >= 2 * pack:
        tm = _round_up((M_aligned + 1) // 2, pack)

    # ---- intermediate tile (I axis, "arbitrary" reduction, last in grid) ----
    ti = _pick_ti(I, ti_req)
    n_i = I // ti

    # ---- VMEM budget: cap at 75% of physical, shrink ti then tm if needed ----
    vmem_budget = int(0.75 * cfg["vmem_bytes"])

    def _est(tm_, ti_, ni_):
        return int(2 * tm_ * H * in_b          # x tile (double-buffered)
                   + 4 * H * ti_ * in_b        # w1 + w3 blocks (double-buffered)
                   + 2 * ti_ * H * in_b        # w2 block (double-buffered)
                   + 2 * tm_ * H * out_b       # output tile (double-buffered)
                   + (tm_ * H * 4 if ni_ > 1 else 0)   # f32 accumulator scratch
                   + 3 * tm_ * ti_ * 4)        # f32 h1/h3/gate temporaries headroom

    while _est(tm, ti, n_i) > vmem_budget:
        new_ti = _pick_ti(I, ti // 2)
        if new_ti < ti:
            ti = new_ti
            n_i = I // ti
            continue
        if tm > pack:
            tm = max(pack, _round_up(tm // 2, pack))
            continue
        break

    Mp = _round_up(M, tm)
    n_m = Mp // tm

    x2d = x.reshape(M, H)
    if Mp != M:
        x2d = jnp.pad(x2d, ((0, Mp - M), (0, 0)))

    # Truthful HBM traffic: weights are re-streamed once per M tile.
    w_bytes = (w1.size + w3.size + w2.size) * jnp.dtype(w1.dtype).itemsize
    cost = pl.CostEstimate(
        flops=6 * Mp * H * I,                  # 2*M*H*I (w1) + 2*M*H*I (w3) + 2*M*I*H (w2)
        transcendentals=Mp * I,                # sigmoid
        bytes_accessed=w_bytes * n_m + x2d.size * in_b + Mp * H * out_b,
    )

    kernel = _mlp_kernel_multi if n_i > 1 else _mlp_kernel_single
    scratch = [pltpu.VMEM((tm, H), jnp.float32)] if n_i > 1 else []
    vmem_limit = int(min(vmem_budget,
                         max(int(1.5 * _est(tm, ti, n_i)), 32 * 1024 * 1024)))

    # NOTE: if a v6e profile still shows exposed w1/w3 DMA after the tm increase,
    # add pipeline_mode=pl.Buffered(3) on the weight BlockSpecs (NOT on v7x: 64 MiB VMEM).
    out = pl.pallas_call(
        kernel,
        out_shape=jax.ShapeDtypeStruct((Mp, H), x.dtype),
        grid_spec=pltpu.PrefetchScalarGridSpec(
            num_scalar_prefetch=0,
            grid=(n_m, n_i),
            in_specs=[
                pl.BlockSpec((tm, H), lambda i, j: (i, 0)),   # x tile
                pl.BlockSpec((H, ti), lambda i, j: (0, j)),   # w1 column block
                pl.BlockSpec((H, ti), lambda i, j: (0, j)),   # w3 column block
                pl.BlockSpec((ti, H), lambda i, j: (j, 0)),   # w2 row block
            ],
            out_specs=pl.BlockSpec((tm, H), lambda i, j: (i, 0)),
            scratch_shapes=scratch,
        ),
        compiler_params=pltpu.CompilerParams(
            dimension_semantics=("parallel", "arbitrary"),
            vmem_limit_bytes=vmem_limit,
        ),
        cost_estimate=cost,
    )(x2d, w1, w3, w2)

    if Mp != M:
        out = out[:M]
    return out.reshape(B, S, H)


def mlp_reference(x, w1, w3, w2):
    h1 = x @ w1
    h3 = x @ w3
    return (jax.nn.silu(h1) * h3) @ w2


if __name__ == "__main__":
    # Small config consistent with the module: hidden_size=128, intermediate_size=256.
    B, S, H, I = 2, 8, 128, 256

    key = jax.random.PRNGKey(0)
    kx, k1, k3, k2 = jax.random.split(key, 4)
    x = jax.random.normal(kx, (B, S, H), dtype=jnp.float32)
    # Deterministic weights, stored as (in_dim, out_dim).
    w1 = jax.random.normal(k1, (H, I), dtype=jnp.float32) * 0.02
    w3 = jax.random.normal(k3, (H, I), dtype=jnp.float32) * 0.02
    w2 = jax.random.normal(k2, (I, H), dtype=jnp.float32) * 0.02

    # f32 path, single-I-block (scratch-free) kernel.
    y32 = jax.block_until_ready(mlp_forward(x, w1, w3, w2))
    y_ref32 = mlp_reference(x, w1, w3, w2)
    assert y32.shape == (B, S, H)
    assert jnp.allclose(y32, y_ref32, atol=1e-4, rtol=1e-4)

    # f32 path, forced multi-I-block reduction kernel (ti=128 -> n_i=2).
    y32m = jax.block_until_ready(mlp_forward(x, w1, w3, w2, ti=128))
    assert jnp.allclose(y32m, y_ref32, atol=1e-4, rtol=1e-4)

    # bf16 path: native MXU operand dtype, f32 accumulation inside the kernel.
    xb = x.astype(jnp.bfloat16)
    w1b, w3b, w2b = (w.astype(jnp.bfloat16) for w in (w1, w3, w2))
    yb = jax.block_until_ready(mlp_forward(xb, w1b, w3b, w2b))
    y_refb = mlp_reference(xb.astype(jnp.float32), w1b.astype(jnp.float32),
                           w3b.astype(jnp.float32), w2b.astype(jnp.float32))
    assert yb.shape == (B, S, H) and yb.dtype == jnp.bfloat16
    assert jnp.allclose(yb.astype(jnp.float32), y_refb, atol=1e-2, rtol=2e-2)

    # TODO(synk): PEFT (LoRA/DoRA) branch of the module is checkpoint/config dependent
    # and not exercised here; only the plain nn.Linear (bias=False) path is implemented.
    print("KERNEL_OK")
</pallas_src>

<mosaic_0001>
module attributes {stable_mosaic.version = 11 : i64} {
  func.func @_mlp_kernel_single(%arg0: i32, %arg1: i32, %arg2: memref<16x128xf32, #tpu.memory_space<vmem>>, %arg3: memref<128x256xf32, #tpu.memory_space<vmem>>, %arg4: memref<128x256xf32, #tpu.memory_space<vmem>>, %arg5: memref<256x128xf32, #tpu.memory_space<vmem>>, %arg6: memref<16x128xf32, #tpu.memory_space<vmem>>) attributes {dimension_semantics = [#tpu.dimension_semantics<parallel>, #tpu.dimension_semantics<arbitrary>], iteration_bounds = array<i64: 1, 1>, scalar_prefetch = 0 : i64, scratch_operands = 0 : i64, tpu.core_type = #tpu.core_type<tc>, window_params = [{transform_indices = @transform_0, window_bounds = array<i64: 16, 128>}, {transform_indices = @transform_1, window_bounds = array<i64: 128, 256>}, {transform_indices = @transform_2, window_bounds = array<i64: 128, 256>}, {transform_indices = @transform_3, window_bounds = array<i64: 256, 128>}, {transform_indices = @transform_4, window_bounds = array<i64: 16, 128>}]} {
    %c0 = arith.constant 0 : index
    %c0_0 = arith.constant 0 : index
    %0 = vector.load %arg2[%c0, %c0_0] : memref<16x128xf32, #tpu.memory_space<vmem>>, vector<16x128xf32>
    %c0_1 = arith.constant 0 : index
    %c0_2 = arith.constant 0 : index
    %1 = vector.load %arg3[%c0_1, %c0_2] : memref<128x256xf32, #tpu.memory_space<vmem>>, vector<128x256xf32>
    %cst = arith.constant dense<0.000000e+00> : vector<16x256xf32>
    %2 = tpu.matmul %0, %1, %cst {dimension_numbers = #tpu.dot_dimension_numbers<[1], [0], [0], [1], [0, 0, 1, 1], [], []>} : vector<16x128xf32>, vector<128x256xf32>, vector<16x256xf32> -> vector<16x256xf32>
    %c0_3 = arith.constant 0 : index
    %c0_4 = arith.constant 0 : index
    %3 = vector.load %arg2[%c0_3, %c0_4] : memref<16x128xf32, #tpu.memory_space<vmem>>, vector<16x128xf32>
    %c0_5 = arith.constant 0 : index
    %c0_6 = arith.constant 0 : index
    %4 = vector.load %arg4[%c0_5, %c0_6] : memref<128x256xf32, #tpu.memory_space<vmem>>, vector<128x256xf32>
    %cst_7 = arith.constant dense<0.000000e+00> : vector<16x256xf32>
    %5 = tpu.matmul %3, %4, %cst_7 {dimension_numbers = #tpu.dot_dimension_numbers<[1], [0], [0], [1], [0, 0, 1, 1], [], []>} : vector<16x128xf32>, vector<128x256xf32>, vector<16x256xf32> -> vector<16x256xf32>
    %6 = arith.negf %2 : vector<16x256xf32>
    %7 = math.exp %6 : vector<16x256xf32>
    %cst_8 = arith.constant 1.000000e+00 : f32
    %8 = vector.broadcast %cst_8 : f32 to vector<16x256xf32>
    %9 = arith.addf %8, %7 : vector<16x256xf32>
    %10 = arith.divf %8, %9 : vector<16x256xf32>
    %11 = arith.mulf %2, %10 : vector<16x256xf32>
    %12 = arith.mulf %11, %5 : vector<16x256xf32>
    %c0_9 = arith.constant 0 : index
    %c0_10 = arith.constant 0 : index
    %13 = vector.load %arg5[%c0_9, %c0_10] : memref<256x128xf32, #tpu.memory_space<vmem>>, vector<256x128xf32>
    %cst_11 = arith.constant dense<0.000000e+00> : vector<16x128xf32>
    %14 = tpu.matmul %12, %13, %cst_11 {dimension_numbers = #tpu.dot_dimension_numbers<[1], [0], [0], [1], [0, 0, 1, 1], [], []>} : vector<16x256xf32>, vector<256x128xf32>, vector<16x128xf32> -> vector<16x128xf32>
    %c0_12 = arith.constant 0 : index
    %c0_13 = arith.constant 0 : index
    %15 = vector.load %arg6[%c0_12, %c0_13] : memref<16x128xf32, #tpu.memory_space<vmem>>, vector<16x128xf32>
    tpu.vector_store %arg6[%c0_12, %c0_13], %14 {strides = array<i32>} : memref<16x128xf32, #tpu.memory_space<vmem>>, vector<16x128xf32>,
    return
  }
  func.func @transform_0(%arg0: i32, %arg1: i32) -> (i32, i32) {
    %c0_i32 = arith.constant 0 : i32
    %c0_i32_0 = arith.constant 0 : i32
    return %arg0, %c0_i32 : i32, i32
  }
  func.func @transform_1(%arg0: i32, %arg1: i32) -> (i32, i32) {
    %c0_i32 = arith.constant 0 : i32
    %c0_i32_0 = arith.constant 0 : i32
    return %c0_i32, %arg1 : i32, i32
  }
  func.func @transform_2(%arg0: i32, %arg1: i32) -> (i32, i32) {
    %c0_i32 = arith.constant 0 : i32
    %c0_i32_0 = arith.constant 0 : i32
    return %c0_i32, %arg1 : i32, i32
  }
  func.func @transform_3(%arg0: i32, %arg1: i32) -> (i32, i32) {
    %c0_i32 = arith.constant 0 : i32
    %c0_i32_0 = arith.constant 0 : i32
    return %arg1, %c0_i32 : i32, i32
  }
  func.func @transform_4(%arg0: i32, %arg1: i32) -> (i32, i32) {
    %c0_i32 = arith.constant 0 : i32
    %c0_i32_0 = arith.constant 0 : i32
    return %arg0, %c0_i32 : i32, i32
  }
}

</mosaic_0001>

<llo_original>
// kernel: tpu_custom_call.1
$region0: #{tpu_custom_call.1}
  #allocation0 [shape = 'u32[]', space=smem, size = 0x4, offset = 0x4, fixed_abs, tag = 'smem constant byte address 0x4 - core index']
  #allocation1 [shape = 'u32[144,128]{1,0:T(1,128)}', space=vmem, size = 0x12000, scoped, tag = 'internal scratch']
  %s0 = inlined_call_operand.hbm [shape: f32[16,128], index: 0, kind: input, shape index: {}]
  %s1 = inlined_call_operand.hbm [shape: f32[128,256], index: 1, kind: input, shape index: {}]
  %s2 = inlined_call_operand.hbm [shape: f32[128,256], index: 2, kind: input, shape index: {}]
  %s3 = inlined_call_operand.hbm [shape: f32[256,128], index: 3, kind: input, shape index: {}]
  %s4 = inlined_call_operand.hbm [shape: f32[16,128], index: 4, kind: output, shape index: {}]
  %s5 = sld [smem:[#allocation0]]
  $region42: #{tpu_custom_call.1} parent=0
    _
  %s7 = ssub.s32 1, %s5
  %s8 = scalar_select 0, %s7, %s5
  $region1: #{tpu_custom_call.1} parent=0
    #allocation2 [shape = 'u8[8192]{0}', space=vmem, size = 0x2000, scoped, tag = 'input window, operand 0, single buffered']
    #allocation3 [shape = 's32[1]{0}', space=sflag, size = 0x4, scoped, tag = 'scoped memory for tpu_custom_call.1']
    #allocation4 [shape = 's32[1]{0}', space=sflag, size = 0x4, scoped, tag = 'scoped memory for tpu_custom_call.1']
    #allocation5 [shape = 'u8[131072]{0}', space=vmem, size = 0x20000, scoped, tag = 'input window, operand 1, single buffered']
    #allocation6 [shape = 's32[1]{0}', space=sflag, size = 0x4, scoped, tag = 'scoped memory for tpu_custom_call.1']
    #allocation7 [shape = 'u8[131072]{0}', space=vmem, size = 0x20000, scoped, tag = 'input window, operand 2, single buffered']
    #allocation8 [shape = 'u8[131072]{0}', space=vmem, size = 0x20000, scoped, tag = 'input window, operand 3, single buffered']
    #allocation9 [shape = 's32[1]{0}', space=sflag, size = 0x4, scoped, tag = 'scoped memory for tpu_custom_call.1']
    #allocation10 [shape = 'u8[8192]{0}', space=vmem, size = 0x2000, scoped, tag = 'output window, operand 0, single buffered']
    %9 = vsyncpa [#allocation3], 0
    %10 = vsyncpa [#allocation6], 0
    %11 = vsyncpa [#allocation9], 0
    %12 = vsyncpa [#allocation4], 0
    // Predicated region
    $region2: #{tpu_custom_call.1} parent=1 // pred_check
      _
    $region3: #{tpu_custom_call.1} parent=1 // pred_check_branch
      %14 = sbr.rel (0) target = $region5
    $region4: #{tpu_custom_call.1} parent=1 // pred_region
      %s16 = ssub.s32 256, 256
      %17 = vsyncadd [#allocation3], %s16
      %s18 = sshll.u32 [#allocation2], 4
      %s19 = int_to_ptr.vmem [resolvable:$true] %s18
      %24 = dma.hbm_to_vmem [thread:$0]  %s0, 256, %s19, [#allocation3], 128, 128, 8
    $region5: #{tpu_custom_call.1} parent=1 // pred_fallthru
      _
    // Predicated region
    $region6: #{tpu_custom_call.1} parent=1 // pred_check
      _
    $region7: #{tpu_custom_call.1} parent=1 // pred_check_branch
      %26 = sbr.rel (0) target = $region9
    $region8: #{tpu_custom_call.1} parent=1 // pred_region
      %s28 = ssub.s32 4096, 4096
      %29 = vsyncadd [#allocation6], %s28
      %s30 = sshll.u32 [#allocation5], 4
      %s31 = int_to_ptr.vmem [resolvable:$true] %s30
      %36 = dma.hbm_to_vmem [thread:$0]  %s1, 4096, %s31, [#allocation6], 256, 256, 16
    $region9: #{tpu_custom_call.1} parent=1 // pred_fallthru
      _
    // Predicated region
    $region10: #{tpu_custom_call.1} parent=1 // pred_check
      _
    $region11: #{tpu_custom_call.1} parent=1 // pred_check_branch
      %38 = sbr.rel (0) target = $region13
    $region12: #{tpu_custom_call.1} parent=1 // pred_region
      %s40 = ssub.s32 4096, 4096
      %41 = vsyncadd [#allocation6], %s40
      %s42 = sshll.u32 [#allocation7], 4
      %s43 = int_to_ptr.vmem [resolvable:$true] %s42
      %48 = dma.hbm_to_vmem [thread:$0]  %s2, 4096, %s43, [#allocation6], 256, 256, 16
    $region13: #{tpu_custom_call.1} parent=1 // pred_fallthru
      _
    // Predicated region
    $region14: #{tpu_custom_call.1} parent=1 // pred_check
      _
    $region15: #{tpu_custom_call.1} parent=1 // pred_check_branch
      %50 = sbr.rel (0) target = $region17
    $region16: #{tpu_custom_call.1} parent=1 // pred_region
      %s52 = ssub.s32 4096, 4096
      %53 = vsyncadd [#allocation9], %s52
      %s54 = sshll.u32 [#allocation8], 4
      %s55 = int_to_ptr.vmem [resolvable:$true] %s54
      %60 = dma.hbm_to_vmem [thread:$0]  %s3, 4096, %s55, [#allocation9], 128, 128, 8
    $region17: #{tpu_custom_call.1} parent=1 // pred_fallthru
      _
    // Predicated region
    $region18: #{tpu_custom_call.1} parent=1 // pred_check
      _
    $region19: #{tpu_custom_call.1} parent=1 // pred_check_branch
      %62 = sbr.rel (0) target = $region21
    $region20: #{tpu_custom_call.1} parent=1 // pred_region
      %63 = dma.done [#allocation3], 256
    $region21: #{tpu_custom_call.1} parent=1 // pred_fallthru
      _
    // Predicated region
    $region22: #{tpu_custom_call.1} parent=1 // pred_check
      _
    $region23: #{tpu_custom_call.1} parent=1 // pred_check_branch
      %65 = sbr.rel (0) target = $region25
    $region24: #{tpu_custom_call.1} parent=1 // pred_region
      %66 = dma.done [#allocation6], 4096
    $region25: #{tpu_custom_call.1} parent=1 // pred_fallthru
      _
    // Predicated region
    $region26: #{tpu_custom_call.1} parent=1 // pred_check
      _
    $region27: #{tpu_custom_call.1} parent=1 // pred_check_branch
      %68 = sbr.rel (0) target = $region29
    $region28: #{tpu_custom_call.1} parent=1 // pred_region
      %69 = dma.done [#allocation6], 4096
    $region29: #{tpu_custom_call.1} parent=1 // pred_fallthru
      _
    // Predicated region
    $region30: #{tpu_custom_call.1} parent=1 // pred_check
      _
    $region31: #{tpu_custom_call.1} parent=1 // pred_check_branch
      %71 = sbr.rel (0) target = $region33
    $region32: #{tpu_custom_call.1} parent=1 // pred_region
      %72 = dma.done [#allocation9], 4096
    $region33: #{tpu_custom_call.1} parent=1 // pred_fallthru
      _
    %v73 = vld [vmem:[#allocation2] sm:$0xff]
    %v74 = vld [vmem:[#allocation2 + $0x8] sm:$0xff]
    %v75 = vld [vmem:[#allocation5] sm:$0xff]
    %v76 = vld [vmem:[#allocation5 + $0x8] sm:$0xff]
    %v77 = vld [vmem:[#allocation5 + $0x10] sm:$0xff]
    %v78 = vld [vmem:[#allocation5 + $0x18] sm:$0xff]
    %v79 = vld [vmem:[#allocation5 + $0x20] sm:$0xff]
    %v80 = vld [vmem:[#allocation5 + $0x28] sm:$0xff]
    %v81 = vld [vmem:[#allocation5 + $0x30] sm:$0xff]
    %v82 = vld [vmem:[#allocation5 + $0x38] sm:$0xff]
    %v83 = vld [vmem:[#allocation5 + $0x40] sm:$0xff]
    %v84 = vld [vmem:[#allocation5 + $0x48] sm:$0xff]
    %v85 = vld [vmem:[#allocation5 + $0x50] sm:$0xff]
    %v86 = vld [vmem:[#allocation5 + $0x58] sm:$0xff]
    %v87 = vld [vmem:[#allocation5 + $0x60] sm:$0xff]
    %v88 = vld [vmem:[#allocation5 + $0x68] sm:$0xff]
    %v89 = vld [vmem:[#allocation5 + $0x70] sm:$0xff]
    %v90 = vld [vmem:[#allocation5 + $0x78] sm:$0xff]
    %v91 = vld [vmem:[#allocation5 + $0x80] sm:$0xff]
    %v92 = vld [vmem:[#allocation5 + $0x88] sm:$0xff]
    %v93 = vld [vmem:[#allocation5 + $0x90] sm:$0xff]
    %v94 = vld [vmem:[#allocation5 + $0x98] sm:$0xff]
    %v95 = vld [vmem:[#allocation5 + $0xa0] sm:$0xff]
    %v96 = vld [vmem:[#allocation5 + $0xa8] sm:$0xff]
    %v97 = vld [vmem:[#allocation5 + $0xb0] sm:$0xff]
    %v98 = vld [vmem:[#allocation5 + $0xb8] sm:$0xff]
    %v99 = vld [vmem:[#allocation5 + $0xc0] sm:$0xff]
    %v100 = vld [vmem:[#allocation5 + $0xc8] sm:$0xff]
    %v101 = vld [vmem:[#allocation5 + $0xd0] sm:$0xff]
    %v102 = vld [vmem:[#allocation5 + $0xd8] sm:$0xff]
    %v103 = vld [vmem:[#allocation5 + $0xe0] sm:$0xff]
    %v104 = vld [vmem:[#allocation5 + $0xe8] sm:$0xff]
    %v105 = vld [vmem:[#allocation5 + $0xf0] sm:$0xff]
    %v106 = vld [vmem:[#allocation5 + $0xf8] sm:$0xff]
    %107 = vmatprep.subr.mxu0 %v76
    %108 = vmatpush1.msra.mxu0 %v75
    %109 = vmatprep.subr.mxu0 %v78
    %110 = vmatpush1.msra.mxu0 %v77
    %111 = vmatprep.subr.mxu0 %v80
    %112 = vmatpush1.msra.mxu0 %v79
    %113 = vmatprep.subr.mxu0 %v82
    %114 = vmatpush1.msra.mxu0 %v81
    %115 = vmatprep.subr.mxu0 %v84
    %116 = vmatpush1.msra.mxu0 %v83
    %117 = vmatprep.subr.mxu0 %v86
    %118 = vmatpush1.msra.mxu0 %v85
    %119 = vmatprep.subr.mxu0 %v88
    %120 = vmatpush1.msra.mxu0 %v87
    %121 = vmatprep.subr.mxu0 %v90
    %122 = vmatpush1.msra.mxu0 %v89
    %123 = vmatprep.subr.mxu0 %v92
    %124 = vmatpush1.msra.mxu0 %v91
    %125 = vmatprep.subr.mxu0 %v94
    %126 = vmatpush1.msra.mxu0 %v93
    %127 = vmatprep.subr.mxu0 %v96
    %128 = vmatpush1.msra.mxu0 %v95
    %129 = vmatprep.subr.mxu0 %v98
    %130 = vmatpush1.msra.mxu0 %v97
    %131 = vmatprep.subr.mxu0 %v100
    %132 = vmatpush1.msra.mxu0 %v99
    %133 = vmatprep.subr.mxu0 %v102
    %134 = vmatpush1.msra.mxu0 %v101
    %135 = vmatprep.subr.mxu0 %v104
    %136 = vmatpush1.msra.mxu0 %v103
    %137 = vmatprep.subr.mxu0 %v106
    %138 = vmatpush1.msra.mxu0 %v105
    %139 = vmatprep.subr.mxu0 0.0
    %140 = vmatpush1.msra.mxu0 0.0
    %141 = vmatprep.subr.mxu0 0.0
    %142 = vmatpush1.msra.mxu0 0.0
    %143 = vmatprep.subr.mxu0 0.0
    %144 = vmatpush1.msra.mxu0 0.0
    %145 = vmatprep.subr.mxu0 0.0
    %146 = vmatpush1.msra.mxu0 0.0
    %147 = vmatprep.subr.mxu0 0.0
    %148 = vmatpush1.msra.mxu0 0.0
    %149 = vmatprep.subr.mxu0 0.0
    %150 = vmatpush1.msra.mxu0 0.0
    %151 = vmatprep.subr.mxu0 0.0
    %152 = vmatpush1.msra.mxu0 0.0
    %153 = vmatprep.subr.mxu0 0.0
    %154 = vmatpush1.msra.mxu0 0.0
    %155 = vmatprep.subr.mxu0 0.0
    %156 = vmatpush1.msra.mxu0 0.0
    %157 = vmatprep.subr.mxu0 0.0
    %158 = vmatpush1.msra.mxu0 0.0
    %159 = vmatprep.subr.mxu0 0.0
    %160 = vmatpush1.msra.mxu0 0.0
    %161 = vmatprep.subr.mxu0 0.0
    %162 = vmatpush1.msra.mxu0 0.0
    %163 = vmatprep.subr.mxu0 0.0
    %164 = vmatpush1.msra.mxu0 0.0
    %165 = vmatprep.subr.mxu0 0.0
    %166 = vmatpush1.msra.mxu0 0.0
    %167 = vmatprep.subr.mxu0 0.0
    %168 = vmatpush1.msra.mxu0 0.0
    %169 = vmatprep.subr.mxu0 0.0
    %170 = vmatpush1.msra.mxu0 0.0
    %171 = vmatprep.mubr.f32.mxu0 0.0
    %172 = vmatmul.mubr.f32.gmra.mrb[0].mxu0 %v73
    %v173 = vpop.f32.mrb[0].mxu0
    %v174 = vadd.f32 0.0, %v173
    %v175 = vpop.f32.mrb[0].mxu0
    %v176 = vadd.f32 0.0, %v175
    %177 = vmatprep.mubr.f32.mxu0 0.0
    %178 = vmatmul.mubr.f32.gmra.mrb[0].mxu0 %v74
    %v179 = vpop.f32.mrb[0].mxu0
    %v180 = vadd.f32 0.0, %v179
    %v181 = vpop.f32.mrb[0].mxu0
    %v182 = vadd.f32 0.0, %v181
    %183 = vdwg.mxu0
    %v184 = vld [vmem:[#allocation7] sm:$0xff]
    %v185 = vld [vmem:[#allocation7 + $0x8] sm:$0xff]
    %v186 = vld [vmem:[#allocation7 + $0x10] sm:$0xff]
    %v187 = vld [vmem:[#allocation7 + $0x18] sm:$0xff]
    %v188 = vld [vmem:[#allocation7 + $0x20] sm:$0xff]
    %v189 = vld [vmem:[#allocation7 + $0x28] sm:$0xff]
    %v190 = vld [vmem:[#allocation7 + $0x30] sm:$0xff]
    %v191 = vld [vmem:[#allocation7 + $0x38] sm:$0xff]
    %v192 = vld [vmem:[#allocation7 + $0x40] sm:$0xff]
    %v193 = vld [vmem:[#allocation7 + $0x48] sm:$0xff]
    %v194 = vld [vmem:[#allocation7 + $0x50] sm:$0xff]
    %v195 = vld [vmem:[#allocation7 + $0x58] sm:$0xff]
    %v196 = vld [vmem:[#allocation7 + $0x60] sm:$0xff]
    %v197 = vld [vmem:[#allocation7 + $0x68] sm:$0xff]
    %v198 = vld [vmem:[#allocation7 + $0x70] sm:$0xff]
    %v199 = vld [vmem:[#allocation7 + $0x78] sm:$0xff]
    %v200 = vld [vmem:[#allocation7 + $0x80] sm:$0xff]
    %v201 = vld [vmem:[#allocation7 + $0x88] sm:$0xff]
    %v202 = vld [vmem:[#allocation7 + $0x90] sm:$0xff]
    %v203 = vld [vmem:[#allocation7 + $0x98] sm:$0xff]
    %v204 = vld [vmem:[#allocation7 + $0xa0] sm:$0xff]
    %v205 = vld [vmem:[#allocation7 + $0xa8] sm:$0xff]
    %v206 = vld [vmem:[#allocation7 + $0xb0] sm:$0xff]
    %v207 = vld [vmem:[#allocation7 + $0xb8] sm:$0xff]
    %v208 = vld [vmem:[#allocation7 + $0xc0] sm:$0xff]
    %v209 = vld [vmem:[#allocation7 + $0xc8] sm:$0xff]
    %v210 = vld [vmem:[#allocation7 + $0xd0] sm:$0xff]
    %v211 = vld [vmem:[#allocation7 + $0xd8] sm:$0xff]
    %v212 = vld [vmem:[#allocation7 + $0xe0] sm:$0xff]
    %v213 = vld [vmem:[#allocation7 + $0xe8] sm:$0xff]
    %v214 = vld [vmem:[#allocation7 + $0xf0] sm:$0xff]
    %v215 = vld [vmem:[#allocation7 + $0xf8] sm:$0xff]
    %216 = vmatprep.subr.mxu0 %v185
    %217 = vmatpush1.msra.mxu0 %v184
    %218 = vmatprep.subr.mxu0 %v187
    %219 = vmatpush1.msra.mxu0 %v186
    %220 = vmatprep.subr.mxu0 %v189
    %221 = vmatpush1.msra.mxu0 %v188
    %222 = vmatprep.subr.mxu0 %v191
    %223 = vmatpush1.msra.mxu0 %v190
    %224 = vmatprep.subr.mxu0 %v193
    %225 = vmatpush1.msra.mxu0 %v192
    %226 = vmatprep.subr.mxu0 %v195
    %227 = vmatpush1.msra.mxu0 %v194
    %228 = vmatprep.subr.mxu0 %v197
    %229 = vmatpush1.msra.mxu0 %v196
    %230 = vmatprep.subr.mxu0 %v199
    %231 = vmatpush1.msra.mxu0 %v198
    %232 = vmatprep.subr.mxu0 %v201
    %233 = vmatpush1.msra.mxu0 %v200
    %234 = vmatprep.subr.mxu0 %v203
    %235 = vmatpush1.msra.mxu0 %v202
    %236 = vmatprep.subr.mxu0 %v205
    %237 = vmatpush1.msra.mxu0 %v204
    %238 = vmatprep.subr.mxu0 %v207
    %239 = vmatpush1.msra.mxu0 %v206
    %240 = vmatprep.subr.mxu0 %v209
    %241 = vmatpush1.msra.mxu0 %v208
    %242 = vmatprep.subr.mxu0 %v211
    %243 = vmatpush1.msra.mxu0 %v210
    %244 = vmatprep.subr.mxu0 %v213
    %245 = vmatpush1.msra.mxu0 %v212
    %246 = vmatprep.subr.mxu0 %v215
    %247 = vmatpush1.msra.mxu0 %v214
    %248 = vmatprep.subr.mxu0 0.0
    %249 = vmatpush1.msra.mxu0 0.0
    %250 = vmatprep.subr.mxu0 0.0
    %251 = vmatpush1.msra.mxu0 0.0
    %252 = vmatprep.subr.mxu0 0.0
    %253 = vmatpush1.msra.mxu0 0.0
    %254 = vmatprep.subr.mxu0 0.0
    %255 = vmatpush1.msra.mxu0 0.0
    %256 = vmatprep.subr.mxu0 0.0
    %257 = vmatpush1.msra.mxu0 0.0
    %258 = vmatprep.subr.mxu0 0.0
    %259 = vmatpush1.msra.mxu0 0.0
    %260 = vmatprep.subr.mxu0 0.0
    %261 = vmatpush1.msra.mxu0 0.0
    %262 = vmatprep.subr.mxu0 0.0
    %263 = vmatpush1.msra.mxu0 0.0
    %264 = vmatprep.subr.mxu0 0.0
    %265 = vmatpush1.msra.mxu0 0.0
    %266 = vmatprep.subr.mxu0 0.0
    %267 = vmatpush1.msra.mxu0 0.0
    %268 = vmatprep.subr.mxu0 0.0
    %269 = vmatpush1.msra.mxu0 0.0
    %270 = vmatprep.subr.mxu0 0.0
    %271 = vmatpush1.msra.mxu0 0.0
    %272 = vmatprep.subr.mxu0 0.0
    %273 = vmatpush1.msra.mxu0 0.0
    %274 = vmatprep.subr.mxu0 0.0
    %275 = vmatpush1.msra.mxu0 0.0
    %276 = vmatprep.subr.mxu0 0.0
    %277 = vmatpush1.msra.mxu0 0.0
    %278 = vmatprep.subr.mxu0 0.0
    %279 = vmatpush1.msra.mxu0 0.0
    %280 = vmatprep.mubr.f32.mxu0 0.0
    %281 = vmatmul.mubr.f32.gmra.mrb[0].mxu0 %v73
    %v282 = vpop.f32.mrb[0].mxu0
    %v283 = vadd.f32 0.0, %v282
    %v284 = vpop.f32.mrb[0].mxu0
    %v285 = vadd.f32 0.0, %v284
    %286 = vmatprep.mubr.f32.mxu0 0.0
    %287 = vmatmul.mubr.f32.gmra.mrb[0].mxu0 %v74
    %v288 = vpop.f32.mrb[0].mxu0
    %v289 = vadd.f32 0.0, %v288
    %v290 = vpop.f32.mrb[0].mxu0
    %v291 = vadd.f32 0.0, %v290
    %292 = vdwg.mxu0
    %v293 = vxor.u32 %v174, 2147483648
    %v294 = vxor.u32 %v176, 2147483648
    %v295 = vxor.u32 %v180, 2147483648
    %v296 = vxor.u32 %v182, 2147483648
    %v297 = vmul.f32 %v293, 1.442695
    %v298 = vpow.pop %v297
    %v299 = vmul.f32 %v294, 1.442695
    %v300 = vpow.pop %v299
    %v301 = vmul.f32 %v295, 1.442695
    %v302 = vpow.pop %v301
    %v303 = vmul.f32 %v296, 1.442695
    %v304 = vpow.pop %v303
    %v305 = vadd.f32 %v298, 1.0
    %v306 = vadd.f32 %v300, 1.0
    %v307 = vadd.f32 %v302, 1.0
    %v308 = vadd.f32 %v304, 1.0
    %v309 = vrcp.pop %v305
    %v310 = vmul.f32 1.0, %v309
    %v311 = vrcp.pop %v306
    %v312 = vmul.f32 1.0, %v311
    %v313 = vrcp.pop %v307
    %v314 = vmul.f32 1.0, %v313
    %v315 = vrcp.pop %v308
    %v316 = vmul.f32 1.0, %v315
    %v317 = vmul.f32 %v174, %v310
    %v318 = vmul.f32 %v176, %v312
    %v319 = vmul.f32 %v180, %v314
    %v320 = vmul.f32 %v182, %v316
    %v321 = vmul.f32 %v317, %v283
    %v322 = vmul.f32 %v318, %v285
    %v323 = vmul.f32 %v319, %v289
    %v324 = vmul.f32 %v320, %v291
    %v325 = vld [vmem:[#allocation8] sm:$0xff]
    %v326 = vld [vmem:[#allocation8 + $0x8] sm:$0xff]
    %v327 = vld [vmem:[#allocation8 + $0x10] sm:$0xff]
    %v328 = vld [vmem:[#allocation8 + $0x18] sm:$0xff]
    %v329 = vld [vmem:[#allocation8 + $0x20] sm:$0xff]
    %v330 = vld [vmem:[#allocation8 + $0x28] sm:$0xff]
    %v331 = vld [vmem:[#allocation8 + $0x30] sm:$0xff]
    %v332 = vld [vmem:[#allocation8 + $0x38] sm:$0xff]
    %v333 = vld [vmem:[#allocation8 + $0x40] sm:$0xff]
    %v334 = vld [vmem:[#allocation8 + $0x48] sm:$0xff]
    %v335 = vld [vmem:[#allocation8 + $0x50] sm:$0xff]
    %v336 = vld [vmem:[#allocation8 + $0x58] sm:$0xff]
    %v337 = vld [vmem:[#allocation8 + $0x60] sm:$0xff]
    %v338 = vld [vmem:[#allocation8 + $0x68] sm:$0xff]
    %v339 = vld [vmem:[#allocation8 + $0x70] sm:$0xff]
    %v340 = vld [vmem:[#allocation8 + $0x78] sm:$0xff]
    %v341 = vld [vmem:[#allocation8 + $0x80] sm:$0xff]
    %v342 = vld [vmem:[#allocation8 + $0x88] sm:$0xff]
    %v343 = vld [vmem:[#allocation8 + $0x90] sm:$0xff]
    %v344 = vld [vmem:[#allocation8 + $0x98] sm:$0xff]
    %v345 = vld [vmem:[#allocation8 + $0xa0] sm:$0xff]
    %v346 = vld [vmem:[#allocation8 + $0xa8] sm:$0xff]
    %v347 = vld [vmem:[#allocation8 + $0xb0] sm:$0xff]
    %v348 = vld [vmem:[#allocation8 + $0xb8] sm:$0xff]
    %v349 = vld [vmem:[#allocation8 + $0xc0] sm:$0xff]
    %v350 = vld [vmem:[#allocation8 + $0xc8] sm:$0xff]
    %v351 = vld [vmem:[#allocation8 + $0xd0] sm:$0xff]
    %v352 = vld [vmem:[#allocation8 + $0xd8] sm:$0xff]
    %v353 = vld [vmem:[#allocation8 + $0xe0] sm:$0xff]
    %v354 = vld [vmem:[#allocation8 + $0xe8] sm:$0xff]
    %v355 = vld [vmem:[#allocation8 + $0xf0] sm:$0xff]
    %v356 = vld [vmem:[#allocation8 + $0xf8] sm:$0xff]
    %357 = vmatprep.subr.mxu0 0.0
    %358 = vmatpush1.msra.mxu0 %v325
    %359 = vmatprep.subr.mxu0 0.0
    %360 = vmatpush1.msra.mxu0 %v326
    %361 = vmatprep.subr.mxu0 0.0
    %362 = vmatpush1.msra.mxu0 %v327
    %363 = vmatprep.subr.mxu0 0.0
    %364 = vmatpush1.msra.mxu0 %v328
    %365 = vmatprep.subr.mxu0 0.0
    %366 = vmatpush1.msra.mxu0 %v329
    %367 = vmatprep.subr.mxu0 0.0
    %368 = vmatpush1.msra.mxu0 %v330
    %369 = vmatprep.subr.mxu0 0.0
    %370 = vmatpush1.msra.mxu0 %v331
    %371 = vmatprep.subr.mxu0 0.0
    %372 = vmatpush1.msra.mxu0 %v332
    %373 = vmatprep.subr.mxu0 0.0
    %374 = vmatpush1.msra.mxu0 %v333
    %375 = vmatprep.subr.mxu0 0.0
    %376 = vmatpush1.msra.mxu0 %v334
    %377 = vmatprep.subr.mxu0 0.0
    %378 = vmatpush1.msra.mxu0 %v335
    %379 = vmatprep.subr.mxu0 0.0
    %380 = vmatpush1.msra.mxu0 %v336
    %381 = vmatprep.subr.mxu0 0.0
    %382 = vmatpush1.msra.mxu0 %v337
    %383 = vmatprep.subr.mxu0 0.0
    %384 = vmatpush1.msra.mxu0 %v338
    %385 = vmatprep.subr.mxu0 0.0
    %386 = vmatpush1.msra.mxu0 %v339
    %387 = vmatprep.subr.mxu0 0.0
    %388 = vmatpush1.msra.mxu0 %v340
    %389 = vmatprep.subr.mxu0 0.0
    %390 = vmatpush1.msra.mxu0 %v341
    %391 = vmatprep.subr.mxu0 0.0
    %392 = vmatpush1.msra.mxu0 %v342
    %393 = vmatprep.subr.mxu0 0.0
    %394 = vmatpush1.msra.mxu0 %v343
    %395 = vmatprep.subr.mxu0 0.0
    %396 = vmatpush1.msra.mxu0 %v344
    %397 = vmatprep.subr.mxu0 0.0
    %398 = vmatpush1.msra.mxu0 %v345
    %399 = vmatprep.subr.mxu0 0.0
    %400 = vmatpush1.msra.mxu0 %v346
    %401 = vmatprep.subr.mxu0 0.0
    %402 = vmatpush1.msra.mxu0 %v347
    %403 = vmatprep.subr.mxu0 0.0
    %404 = vmatpush1.msra.mxu0 %v348
    %405 = vmatprep.subr.mxu0 0.0
    %406 = vmatpush1.msra.mxu0 %v349
    %407 = vmatprep.subr.mxu0 0.0
    %408 = vmatpush1.msra.mxu0 %v350
    %409 = vmatprep.subr.mxu0 0.0
    %410 = vmatpush1.msra.mxu0 %v351
    %411 = vmatprep.subr.mxu0 0.0
    %412 = vmatpush1.msra.mxu0 %v352
    %413 = vmatprep.subr.mxu0 0.0
    %414 = vmatpush1.msra.mxu0 %v353
    %415 = vmatprep.subr.mxu0 0.0
    %416 = vmatpush1.msra.mxu0 %v354
    %417 = vmatprep.subr.mxu0 0.0
    %418 = vmatpush1.msra.mxu0 %v355
    %419 = vmatprep.subr.mxu0 0.0
    %420 = vmatpush1.msra.mxu0 %v356
    %421 = vmatprep.mubr.f32.mxu0 %v322
    %422 = vmatmul.mubr.f32.gmra.mrb[0].mxu0 %v321
    %v423 = vpop.f32.mrb[0].mxu0
    %v424 = vadd.f32 0.0, %v423
    %v425 = vpop.f32.mrb[0].mxu0
    %426 = vmatprep.mubr.f32.mxu0 %v324
    %427 = vmatmul.mubr.f32.gmra.mrb[0].mxu0 %v323
    %v428 = vpop.f32.mrb[0].mxu0
    %v429 = vadd.f32 0.0, %v428
    %v430 = vpop.f32.mrb[0].mxu0
    %431 = vdwg.mxu0
    %432 = vst [vmem:[#allocation10] sm:$0xff] %v424
    %433 = vst [vmem:[#allocation10 + $0x8] sm:$0xff] %v429
    // Predicated region
    $region34: #{tpu_custom_call.1} parent=1 // pred_check
      _
    $region35: #{tpu_custom_call.1} parent=1 // pred_check_branch
      %435 = sbr.rel (0) target = $region37
    $region36: #{tpu_custom_call.1} parent=1 // pred_region
      %s437 = ssub.s32 256, 256
      %438 = vsyncadd [#allocation4], %s437
      %s439 = sshll.u32 [#allocation10], 4
      %s440 = int_to_ptr.vmem [resolvable:$true] %s439
      %445 = dma.vmem_to_hbm [thread:$0]  %s440, 256, %s4, [#allocation4], 128, 128, 8
    $region37: #{tpu_custom_call.1} parent=1 // pred_fallthru
      _
    // Predicated region
    $region38: #{tpu_custom_call.1} parent=1 // pred_check
      _
    $region39: #{tpu_custom_call.1} parent=1 // pred_check_branch
      %447 = sbr.rel (0) target = $region41
    $region40: #{tpu_custom_call.1} parent=1 // pred_region
      %448 = dma.done [#allocation4], 256
    $region41: #{tpu_custom_call.1} parent=1 // pred_fallthru
      _
    %449 = vsyncpa [#allocation3], 1
    %450 = vsyncpa [#allocation6], 1
    %451 = vsyncpa [#allocation9], 1
    %452 = vsyncpa [#allocation4], 1

</llo_original>
